<compile_context>
chip_gen: v5e
topology: v5e:2x2
jax: 0.10.0
libtpu: 0.0.40
codegen_flags: <defaults>
</compile_context>

<pallas_src>
import jax
import jax.numpy as jnp
from jax import lax
from jax.experimental import pallas as pl
from jax.experimental.pallas import tpu as pltpu


# ---------------------------------------------------------------------------
# Kernel 1: 1x1 conv == per-batch channel matmul + bias (full L per step)
#   x_ref : (1, C_in, L) bf16    w_ref : (C_out, C_in) bf16
#   b_ref : (C_out, 1)  f32      y_ref : (1, C_out, L) bf16
# ---------------------------------------------------------------------------
def conv1x1_kernel(x_ref, w_ref, b_ref, y_ref):
    # (C_out, C_in) . (C_in, L) -> (C_out, L), f32 MXU accumulation.
    y = jnp.dot(w_ref[...], x_ref[0], preferred_element_type=jnp.float32)
    y_ref[0] = (y + b_ref[...]).astype(y_ref.dtype)   # bias bcast over lanes


# ---------------------------------------------------------------------------
# Kernel 2: fully connected, D_out tiled (parallel) x K tiled (reduction)
#   y_ref : (B, tk)  bf16      w_ref : (tk, tn) bf16   (pre-transposed layout)
#   b_ref : (1, tn)  f32       o_ref : (B, tn)  f32
#   acc_ref: VMEM (B, tn) f32
# ---------------------------------------------------------------------------
def fc_kernel(y_ref, w_ref, b_ref, o_ref, acc_ref):
    k = pl.program_id(1)

    @pl.when(k == 0)
    def _():
        acc_ref[...] = jnp.zeros_like(acc_ref)

    # Canonical (M,K)x(K,N): (B, tk) . (tk, tn) -> (B, tn).  No operand
    # transpose needed -> the 16 MiB weight tile never touches the XLU;
    # the kernel stays at the HBM-bandwidth roofline.
    acc_ref[...] += jnp.dot(y_ref[...], w_ref[...],
                            preferred_element_type=jnp.float32)

    @pl.when(k == pl.num_programs(1) - 1)
    def _():
        o_ref[...] = acc_ref[...] + b_ref[...]


# ---------------------------------------------------------------------------
# One-time (parameter-init-time) preparation of the FC weight.
# ---------------------------------------------------------------------------
def prepare_fc_weight(w_fc):
    """Transpose (D_out, K) -> (K, D_out) and cast to bf16 ONCE at init.

    This single pass over the (huge) weight must never sit in the per-forward
    path; the forward kernel then streams it directly with no per-call cast
    and no per-step MXU-orientation transpose.
    """
    return jnp.asarray(w_fc).T.astype(jnp.bfloat16)


def _pick_tile(dim, preferred, align=128):
    """Largest multiple of `align` that is <= preferred and divides dim."""
    t = min(preferred, dim)
    t = max(align, (t // align) * align)
    while t > align and dim % t != 0:
        t -= align
    if dim % t != 0:
        t = dim                      # fall back to full extent (always valid)
    return t


def reduced_kernel_conv(x, w_conv, b_conv, w_fc_t, b_fc, *,
                        tn=1024, tk=8192,
                        fc_vmem_limit_bytes=48 * 1024 * 1024):
    """Forward pass of ReducedKernelConv.

    x      : (B, C_in, L)   float32 (or bf16)
    w_conv : (C_out, C_in)  1x1 conv kernel, spatial dims squeezed
    b_conv : (C_out,)
    w_fc_t : (C_out*L, D_out) bf16 — output of prepare_fc_weight() (init-time)
    b_fc   : (D_out,)
    returns: (B, D_out)     float32
    """
    B, C_in, L = x.shape
    C_out = w_conv.shape[0]
    K, D_out = w_fc_t.shape
    assert K == C_out * L, "fc in_features must equal C_out * L"

    tn = _pick_tile(D_out, tn)       # lane dim of weight/output tiles
    tk = _pick_tile(K, tk)           # reduction tile (last dim of y tile)

    # -------------------- stage 1: 1x1 conv (full L per batch step) ---------
    x_bf = x if x.dtype == jnp.bfloat16 else x.astype(jnp.bfloat16)
    w_conv_bf = w_conv.astype(jnp.bfloat16)                  # tiny, cheap
    b_conv_2d = b_conv.astype(jnp.float32).reshape(C_out, 1)

    conv = pl.pallas_call(
        conv1x1_kernel,
        out_shape=jax.ShapeDtypeStruct((B, C_out, L), jnp.bfloat16),
        grid_spec=pltpu.PrefetchScalarGridSpec(
            num_scalar_prefetch=0,
            grid=(B,),
            in_specs=[
                pl.BlockSpec((1, C_in, L), lambda b: (b, 0, 0)),
                pl.BlockSpec((C_out, C_in), lambda b: (0, 0)),
                pl.BlockSpec((C_out, 1), lambda b: (0, 0)),
            ],
            out_specs=pl.BlockSpec((1, C_out, L), lambda b: (b, 0, 0)),
        ),
        compiler_params=pltpu.CompilerParams(
            dimension_semantics=("parallel",)),
    )
    y = conv(x_bf, w_conv_bf, b_conv_2d)                     # (B, C_out, L) bf16

    # -------------------- glue: flatten (matches torch .view(B, -1)) --------
    y_flat = y.reshape(B, K)                                 # row-major: o*L + l

    b_fc_2d = b_fc.astype(jnp.float32).reshape(1, D_out)

    # -------------------- stage 2: fully connected ---------------------------
    fc = pl.pallas_call(
        fc_kernel,
        out_shape=jax.ShapeDtypeStruct((B, D_out), jnp.float32),
        grid_spec=pltpu.PrefetchScalarGridSpec(
            num_scalar_prefetch=0,
            grid=(D_out // tn, K // tk),                     # (parallel, reduction)
            in_specs=[
                pl.BlockSpec((B, tk), lambda n, k: (0, k)),
                pl.BlockSpec((tk, tn), lambda n, k: (k, n)),
                pl.BlockSpec((1, tn), lambda n, k: (0, n)),
            ],
            out_specs=pl.BlockSpec((B, tn), lambda n, k: (0, n)),
            scratch_shapes=[pltpu.VMEM((B, tn), jnp.float32)],
        ),
        compiler_params=pltpu.CompilerParams(
            dimension_semantics=("parallel", "arbitrary"),
            vmem_limit_bytes=fc_vmem_limit_bytes),
    )
    return fc(y_flat, w_fc_t, b_fc_2d)


if __name__ == "__main__":
    # Scaled-down config (structure identical to the PyTorch module).
    B, C_IN, C_OUT, L, D_OUT = 2, 32, 64, 256, 128
    K = C_OUT * L

    key = jax.random.PRNGKey(0)
    kx, kwc, kbc, kwf, kbf = jax.random.split(key, 5)

    x = jax.random.normal(kx, (B, C_IN, L), dtype=jnp.float32)
    # Deterministic parameter init (synthetic; shapes follow the module).
    w_conv = 0.05 * jax.random.normal(kwc, (C_OUT, C_IN), dtype=jnp.float32)
    b_conv = 0.05 * jax.random.normal(kbc, (C_OUT,), dtype=jnp.float32)
    w_fc = 0.01 * jax.random.normal(kwf, (D_OUT, K), dtype=jnp.float32)
    b_fc = 0.01 * jax.random.normal(kbf, (D_OUT,), dtype=jnp.float32)

    # One-time init-side preparation of the FC weight (transpose + bf16 cast).
    w_fc_t = prepare_fc_weight(w_fc)                         # (K, D_OUT) bf16
    w_fc_t = jax.block_until_ready(w_fc_t)

    out = reduced_kernel_conv(x, w_conv, b_conv, w_fc_t, b_fc)
    out = jax.block_until_ready(out)

    # Pure-JAX reference using the SAME bf16 quantization as the kernels
    # (bf16 inputs, f32 accumulation) -> tight tolerance still valid.
    x_bf = x.astype(jnp.bfloat16).astype(jnp.float32)
    wc_bf = w_conv.astype(jnp.bfloat16).astype(jnp.float32)
    y_ref = jnp.einsum("oc,bcl->bol", wc_bf, x_bf,
                       precision=lax.Precision.HIGHEST) + b_conv[None, :, None]
    y_ref_bf = y_ref.astype(jnp.bfloat16).astype(jnp.float32)
    ref = (jnp.dot(y_ref_bf.reshape(B, -1), w_fc_t.astype(jnp.float32),
                   precision=lax.Precision.HIGHEST)
           + b_fc[None, :])

    assert out.shape == (B, D_OUT)
    assert jnp.allclose(out, ref, atol=1e-2, rtol=1e-2), "mismatch vs reference"

    print("KERNEL_OK")
</pallas_src>

<mosaic_0001>
module attributes {stable_mosaic.version = 11 : i64} {
  func.func @conv1x1_kernel(%arg0: i32, %arg1: memref<1x32x256xbf16, #tpu.memory_space<vmem>>, %arg2: memref<64x32xbf16, #tpu.memory_space<vmem>>, %arg3: memref<64x1xf32, #tpu.memory_space<vmem>>, %arg4: memref<1x64x256xbf16, #tpu.memory_space<vmem>>) attributes {dimension_semantics = [#tpu.dimension_semantics<parallel>], iteration_bounds = array<i64: 2>, scalar_prefetch = 0 : i64, scratch_operands = 0 : i64, tpu.core_type = #tpu.core_type<tc>, window_params = [{transform_indices = @transform_0, window_bounds = array<i64: 1, 32, 256>}, {pipeline_mode = #tpu.pipeline_mode<synchronous>, transform_indices = @transform_1, window_bounds = array<i64: 64, 32>}, {pipeline_mode = #tpu.pipeline_mode<synchronous>, transform_indices = @transform_2, window_bounds = array<i64: 64, 1>}, {transform_indices = @transform_3, window_bounds = array<i64: 1, 64, 256>}]} {
    %c0 = arith.constant 0 : index
    %c0_0 = arith.constant 0 : index
    %0 = vector.load %arg2[%c0, %c0_0] : memref<64x32xbf16, #tpu.memory_space<vmem>>, vector<64x32xbf16>
    %c0_1 = arith.constant 0 : index
    %c0_2 = arith.constant 0 : index
    %c0_3 = arith.constant 0 : index
    %1 = vector.load %arg1[%c0_1, %c0_2, %c0_3] : memref<1x32x256xbf16, #tpu.memory_space<vmem>>, vector<1x32x256xbf16>
    %2 = vector.shape_cast %1 : vector<1x32x256xbf16> to vector<32x256xbf16>
    %cst = arith.constant dense<0.000000e+00> : vector<64x256xf32>
    %3 = tpu.matmul %0, %2, %cst {dimension_numbers = #tpu.dot_dimension_numbers<[1], [0], [0], [1], [0, 0, 1, 1], [], []>} : vector<64x32xbf16>, vector<32x256xbf16>, vector<64x256xf32> -> vector<64x256xf32>
    %c0_4 = arith.constant 0 : index
    %c0_5 = arith.constant 0 : index
    %4 = vector.load %arg3[%c0_4, %c0_5] : memref<64x1xf32, #tpu.memory_space<vmem>>, vector<64x1xf32>
    %5 = vector.broadcast %4 : vector<64x1xf32> to vector<64x256xf32>
    %6 = arith.addf %3, %5 : vector<64x256xf32>
    %7 = arith.truncf %6 : vector<64x256xf32> to vector<64x256xbf16>
    %c0_6 = arith.constant 0 : index
    %c0_7 = arith.constant 0 : index
    %c0_8 = arith.constant 0 : index
    %8 = vector.load %arg4[%c0_6, %c0_7, %c0_8] : memref<1x64x256xbf16, #tpu.memory_space<vmem>>, vector<1x64x256xbf16>
    %9 = vector.shape_cast %8 : vector<1x64x256xbf16> to vector<64x256xbf16>
    %10 = vector.shape_cast %7 : vector<64x256xbf16> to vector<1x64x256xbf16>
    tpu.vector_store %arg4[%c0_6, %c0_7, %c0_8], %10 {strides = array<i32>} : memref<1x64x256xbf16, #tpu.memory_space<vmem>>, vector<1x64x256xbf16>,
    return
  }
  func.func @transform_0(%arg0: i32) -> (i32, i32, i32) {
    %c0_i32 = arith.constant 0 : i32
    %c0_i32_0 = arith.constant 0 : i32
    %c0_i32_1 = arith.constant 0 : i32
    return %arg0, %c0_i32, %c0_i32_0 : i32, i32, i32
  }
  func.func @transform_1(%arg0: i32) -> (i32, i32) {
    %c0_i32 = arith.constant 0 : i32
    %c0_i32_0 = arith.constant 0 : i32
    %c0_i32_1 = arith.constant 0 : i32
    return %c0_i32, %c0_i32_0 : i32, i32
  }
  func.func @transform_2(%arg0: i32) -> (i32, i32) {
    %c0_i32 = arith.constant 0 : i32
    %c0_i32_0 = arith.constant 0 : i32
    %c0_i32_1 = arith.constant 0 : i32
    return %c0_i32, %c0_i32_0 : i32, i32
  }
  func.func @transform_3(%arg0: i32) -> (i32, i32, i32) {
    %c0_i32 = arith.constant 0 : i32
    %c0_i32_0 = arith.constant 0 : i32
    %c0_i32_1 = arith.constant 0 : i32
    return %arg0, %c0_i32, %c0_i32_0 : i32, i32, i32
  }
}

</mosaic_0001>

<llo_original>
// kernel: tpu_custom_call.1
$region0: #{tpu_custom_call.1}
  #allocation0 [shape = 'u32[]', space=smem, size = 0x4, offset = 0x4, fixed_abs, tag = 'smem constant byte address 0x4 - core index']
  #allocation1 [shape = 'u32[72,128]{1,0:T(1,128)}', space=vmem, size = 0x9000, scoped, tag = 'internal scratch']
  %s0 = inlined_call_operand.vmem [shape: bf16[2,32,256], index: 0, kind: input, shape index: {}]
  %s1 = inlined_call_operand.vmem [shape: bf16[64,32], index: 1, kind: input, shape index: {}]
  %s2 = inlined_call_operand.vmem [shape: f32[64,1], index: 2, kind: input, shape index: {}]
  %s3 = inlined_call_operand.hbm [shape: bf16[2,64,256], index: 3, kind: output, shape index: {}]
  %s4 = sld [smem:[#allocation0]]
  $region45: #{tpu_custom_call.1} parent=0
    _
  %s6 = ssub.s32 1, %s4
  %s7 = scalar_select 0, %s6, %s4
  $region1: #{tpu_custom_call.1} parent=0
    #allocation2 [shape = 'u8[65536]{0}', space=vmem, size = 0x10000, scoped, tag = 'output window, operand 0']
    #allocation3 [shape = 's32[2]{0}', space=sflag, size = 0x8, scoped, tag = 'scoped memory for tpu_custom_call.1']
    %8 = vsyncpa [#allocation3], 0
    %s9 = scalar_lea.sflag [#allocation3], 1
    %10 = vsyncpa %s9, 0
    loop: start=0, step=1, limit=4
    $region2: #{tpu_custom_call.1} parent=1 // loop_pre_header
      _
    $region3: #{tpu_custom_call.1} parent=1 // loop_header
      %s12 = sphi 0, %s16
      %p13 = scmp.ge.s32.totalorder %s12, 4
      %s22 = sphi 0, %s24
      %s25 = sphi 0, %s22
      %s26 = sphi 0, %s25
      %s42 = sphi 0, %s26
      %s46 = sphi 0, %s46
      %s48 = sphi 0, %s46
      %s49 = sphi 0, %s48
      %s63 = sphi 0, %s49
      %s67 = sphi 0, %s67
      %s69 = sphi 0, %s67
      %s70 = sphi 0, %s69
      %s84 = sphi 0, %s70
      %s90 = sphi 0, %s92
      %s93 = sphi 0, %s90
      %s94 = sphi 0, %s93
      %s110 = sphi 0, %s94
    $region4: #{tpu_custom_call.1} parent=1 // loop_header_branch
      %15 = sbr.rel (%p13) target = $region8
    $region5: #{tpu_custom_call.1} parent=1 // loop_body
      %s17 = ssub.s32 %s12, 1
      %s18 = ssub.s32 %s12, 2
      %s19 = sadd.s32 %s12, 1
      %s20 = ssub.s32 %s12, %s19
      %p21 = scmp.eq.s32.totalorder %s20, 0
      %s23 = sadd.s32 %s22, 1
      %s24 = scalar_select %p21, %s22, %s23
      %p27 = pneg %p21
      %p28 = scmp.eq.s32.totalorder %s12, 1
      %p29 = por %p27, %p28
      %p30 = scmp.ne.s32.totalorder %s22, %s25
      %p31 = scmp.eq.s32.totalorder %s12, 0
      %p32 = por %p30, %p31
      %p33 = scmp.ne.s32.totalorder %s22, %s25
      %p34 = scmp.eq.s32.totalorder %s17, 1
      %p35 = por %p33, %p34
      %p36 = scmp.ne.s32.totalorder %s25, %s26
      %p37 = scmp.eq.s32.totalorder %s17, 0
      %p38 = por %p36, %p37
      %p39 = scmp.ne.s32.totalorder %s25, %s26
      %p40 = scmp.eq.s32.totalorder %s18, 1
      %p41 = por %p39, %p40
      %p43 = scmp.ne.s32.totalorder %s26, %s42
      %p44 = scmp.eq.s32.totalorder %s18, 0
      %p45 = por %p43, %p44
      %s47 = sadd.s32 %s46, 1
      %p50 = scmp.eq.s32.totalorder %s12, 1
      %p51 = scmp.ne.s32.totalorder %s46, %s48
      %p52 = scmp.eq.s32.totalorder %s12, 0
      %p53 = por %p51, %p52
      %p54 = scmp.ne.s32.totalorder %s46, %s48
      %p55 = scmp.eq.s32.totalorder %s17, 1
      %p56 = por %p54, %p55
      %p57 = scmp.ne.s32.totalorder %s48, %s49
      %p58 = scmp.eq.s32.totalorder %s17, 0
      %p59 = por %p57, %p58
      %p60 = scmp.ne.s32.totalorder %s48, %s49
      %p61 = scmp.eq.s32.totalorder %s18, 1
      %p62 = por %p60, %p61
      %p64 = scmp.ne.s32.totalorder %s49, %s63
      %p65 = scmp.eq.s32.totalorder %s18, 0
      %p66 = por %p64, %p65
      %s68 = sadd.s32 %s67, 1
      %p71 = scmp.eq.s32.totalorder %s12, 1
      %p72 = scmp.ne.s32.totalorder %s67, %s69
      %p73 = scmp.eq.s32.totalorder %s12, 0
      %p74 = por %p72, %p73
      %p75 = scmp.ne.s32.totalorder %s67, %s69
      %p76 = scmp.eq.s32.totalorder %s17, 1
      %p77 = por %p75, %p76
      %p78 = scmp.ne.s32.totalorder %s69, %s70
      %p79 = scmp.eq.s32.totalorder %s17, 0
      %p80 = por %p78, %p79
      %p81 = scmp.ne.s32.totalorder %s69, %s70
      %p82 = scmp.eq.s32.totalorder %s18, 1
      %p83 = por %p81, %p82
      %p85 = scmp.ne.s32.totalorder %s70, %s84
      %p86 = scmp.eq.s32.totalorder %s18, 0
      %p87 = por %p85, %p86
      %s88 = ssub.s32 %s12, %s19
      %p89 = scmp.eq.s32.totalorder %s88, 0
      %s91 = sadd.s32 %s90, 1
      %s92 = scalar_select %p89, %s90, %s91
      %p95 = pneg %p89
      %p96 = scmp.eq.s32.totalorder %s12, 1
      %p97 = por %p95, %p96
      %p98 = scmp.ne.s32.totalorder %s90, %s93
      %p99 = scmp.eq.s32.totalorder %s12, 0
      %p100 = por %p98, %p99
      %p101 = scmp.ne.s32.totalorder %s90, %s93
      %p102 = scmp.eq.s32.totalorder %s17, 1
      %p103 = por %p101, %p102
      %p104 = scmp.ne.s32.totalorder %s93, %s94
      %p105 = scmp.eq.s32.totalorder %s17, 0
      %p106 = por %p104, %p105
      %p107 = scmp.ne.s32.totalorder %s93, %s94
      %p108 = scmp.eq.s32.totalorder %s18, 1
      %p109 = por %p107, %p108
      %p111 = scmp.ne.s32.totalorder %s94, %s110
      %p112 = scmp.eq.s32.totalorder %s18, 0
      %p113 = por %p111, %p112
      %p114 = scmp.le.s32.totalorder 1, %s12
      %p115 = scmp.lt.s32.totalorder %s12, 3
      %p116 = pnand %p114, %p115
      %p117 = pneg %p116
      // Predicated region
      $region9: #{tpu_custom_call.1} parent=5 // pred_check
        _
      $region10: #{tpu_custom_call.1} parent=5 // pred_check_branch
        %119 = sbr.rel (%p116) target = $region12
      $region11: #{tpu_custom_call.1} parent=5 // pred_region
        %s120 = ssub.s32 %s12, 1
        // Predicated region
        $region13: #{tpu_custom_call.1} parent=11 // pred_check
          %p121 = pneg %p59
        $region14: #{tpu_custom_call.1} parent=11 // pred_check_branch
          %123 = sbr.rel (%p121) target = $region16
        $region15: #{tpu_custom_call.1} parent=11 // pred_region
          _
        $region16: #{tpu_custom_call.1} parent=11 // pred_fallthru
          _
        // Predicated region
        $region17: #{tpu_custom_call.1} parent=11 // pred_check
          %p124 = pneg %p80
        $region18: #{tpu_custom_call.1} parent=11 // pred_check_branch
          %126 = sbr.rel (%p124) target = $region20
        $region19: #{tpu_custom_call.1} parent=11 // pred_region
          _
        $region20: #{tpu_custom_call.1} parent=11 // pred_fallthru
          _
      $region12: #{tpu_custom_call.1} parent=5 // pred_fallthru
        _
      %p127 = scmp.lt.s32.totalorder %s12, 2
      // Predicated region
      $region21: #{tpu_custom_call.1} parent=5 // pred_check
        %p128 = pneg %p127
      $region22: #{tpu_custom_call.1} parent=5 // pred_check_branch
        %130 = sbr.rel (%p128) target = $region24
      $region23: #{tpu_custom_call.1} parent=5 // pred_region
        // Predicated region
        $region25: #{tpu_custom_call.1} parent=23 // pred_check
          %p131 = pneg %p32
        $region26: #{tpu_custom_call.1} parent=23 // pred_check_branch
          %133 = sbr.rel (%p131) target = $region28
        $region27: #{tpu_custom_call.1} parent=23 // pred_region
          %p134 = scmp.lt.s32.totalorder %s12, 1
          %s135 = scalar_select %p134, %s12, 1
          %s136 = smul.addr %s135, 8
          %s137 = smul.addr %s136, 4
          %s138 = scalar_lea.vmem %s0, %s137
        $region28: #{tpu_custom_call.1} parent=23 // pred_fallthru
          _
      $region24: #{tpu_custom_call.1} parent=5 // pred_fallthru
        _
      %p139 = scmp.le.s32.totalorder 1, %s12
      %p140 = scmp.lt.s32.totalorder %s12, 3
      %p141 = pnand %p139, %p140
      %p142 = pneg %p141
      // Predicated region
      $region29: #{tpu_custom_call.1} parent=5 // pred_check
        _
      $region30: #{tpu_custom_call.1} parent=5 // pred_check_branch
        %144 = sbr.rel (%p141) target = $region32
      $region31: #{tpu_custom_call.1} parent=5 // pred_region
        %s145 = ssub.s32 %s12, 1
        %p146 = scmp.lt.s32.totalorder %s17, 1
        %s147 = scalar_select %p146, %s17, 1
        %s148 = smul.addr %s147, 8
        %s149 = smul.addr %s148, 4
        %s150 = scalar_lea.vmem %s0, %s149
        %p151 = pneg %p38
        %p152 = pneg %p35
        %p153 = pneg %p59
        %p154 = pneg %p56
        %p155 = pneg %p80
        %p156 = pneg %p77
        %p157 = pneg %p106
        %p158 = pneg %p103
        %s159 = sand.u32 %s93, 1
        %s160 = scalar_lea.sflag [#allocation3], %s159
        %s161 = sand.u32 %s93, 1
        %s162 = smul.addr %s161, 64
        %s163 = scalar_lea.vmem [#allocation2], %s162
        %p164 = scmp.lt.s32.totalorder %s17, 1
        %s165 = scalar_select %p164, %s17, 1
        %s166 = smul.addr %s165, 8
        %s167 = smul.addr %s166, 4
        %s168 = scalar_lea.vmem %s0, %s167
        %v170 = vld [vmem:[%s1] sm:$0xf]
        %v171 = vld [vmem:[%s1 + $0x4] sm:$0xf]
        %v172 = vld [vmem:[%s1 + $0x8] sm:$0xf]
        %v173 = vld [vmem:[%s1 + $0xc] sm:$0xf]
        %v174 = vld [vmem:[%s1 + $0x10] sm:$0xf]
        %v175 = vld [vmem:[%s1 + $0x14] sm:$0xf]
        %v176 = vld [vmem:[%s1 + $0x18] sm:$0xf]
        %v177 = vld [vmem:[%s1 + $0x1c] sm:$0xf]
        %v178 = vld [vmem:[%s168] sm:$0xff]
        %v179 = vld [vmem:[%s168 + $0x8] sm:$0xff]
        %v180 = vld [vmem:[%s168 + $0x10] sm:$0xff]
        %v181 = vld [vmem:[%s168 + $0x18] sm:$0xff]
        %v182 = vld [vmem:[%s2] sm:$0xff]
        %v183 = vld [vmem:[%s2 + $0x8] sm:$0xff]
        %v184 = vld [vmem:[%s2 + $0x10] sm:$0xff]
        %v185 = vld [vmem:[%s2 + $0x18] sm:$0xff]
        %v186 = vld [vmem:[%s2 + $0x20] sm:$0xff]
        %v187 = vld [vmem:[%s2 + $0x28] sm:$0xff]
        %v188 = vld [vmem:[%s2 + $0x30] sm:$0xff]
        %v189 = vld [vmem:[%s2 + $0x38] sm:$0xff]
        %191 = vset.pattern.permute.xlu0 0
        %192 = vperm.xlu0 %191, %v182
        %v193 = vpop.permute.xlu0 %192
        %196 = vset.pattern.permute.xlu0 0
        %197 = vperm.xlu0 %196, %v183
        %v198 = vpop.permute.xlu0 %197
        %201 = vset.pattern.permute.xlu0 0
        %202 = vperm.xlu0 %201, %v184
        %v203 = vpop.permute.xlu0 %202
        %206 = vset.pattern.permute.xlu0 0
        %207 = vperm.xlu0 %206, %v185
        %v208 = vpop.permute.xlu0 %207
        %211 = vset.pattern.permute.xlu0 0
        %212 = vperm.xlu0 %211, %v186
        %v213 = vpop.permute.xlu0 %212
        %216 = vset.pattern.permute.xlu0 0
        %217 = vperm.xlu0 %216, %v187
        %v218 = vpop.permute.xlu0 %217
        %221 = vset.pattern.permute.xlu0 0
        %222 = vperm.xlu0 %221, %v188
        %v223 = vpop.permute.xlu0 %222
        %226 = vset.pattern.permute.xlu0 0
        %227 = vperm.xlu0 %226, %v189
        %v228 = vpop.permute.xlu0 %227
        %v238 = vunpack.c.l.b16 %v170
        %v239 = vunpack.c.l.b16 %v171
        %v240 = vunpack.c.l.b16 %v172
        %v241 = vunpack.c.l.b16 %v173
        %v242 = vunpack.c.l.b16 %v174
        %v243 = vunpack.c.l.b16 %v175
        %v244 = vunpack.c.l.b16 %v176
        %v245 = vunpack.c.l.b16 %v177
        %v246 = vpack.c.b16 %v239, %v238
        %v247 = vpack.c.b16 %v241, %v240
        %v248 = vpack.c.b16 %v243, %v242
        %v249 = vpack.c.b16 %v245, %v244
        %v254 = vunpack.c.l.b16 %v178
        %v255 = vunpack.c.h.b16 %v178
        %v256 = vunpack.c.l.b16 %v179
        %v257 = vunpack.c.h.b16 %v179
        %v258 = vunpack.c.l.b16 %v180
        %v259 = vunpack.c.h.b16 %v180
        %v260 = vunpack.c.l.b16 %v181
        %v261 = vunpack.c.h.b16 %v181
        %v262 = vpack.c.b16 %v256, %v254
        %v263 = vpack.c.b16 %v257, %v255
        %v264 = vpack.c.b16 %v260, %v258
        %v265 = vpack.c.b16 %v261, %v259
        %vm270 = vcmask 261120
        %v272 = vsel %vm270, %v246, 0
        %v275 = vsel %vm270, %v247, 0
        %v278 = vsel %vm270, %v248, 0
        %v281 = vsel %vm270, %v249, 0
        %283 = vmatpush.bf16.msra.mxu0 0
        %284 = vmatpush.bf16.msra.mxu0 0
        %285 = vmatpush.bf16.msra.mxu0 0
        %286 = vmatpush.bf16.msra.mxu0 0
        %287 = vmatpush.bf16.msra.mxu0 0
        %288 = vmatpush.bf16.msra.mxu0 0
        %289 = vmatpush.bf16.msra.mxu0 %v264
        %290 = vmatpush.bf16.msra.mxu0 %v262
        %291 = vmatmul.bf16.gmra.mxu0 %v272
        %v292 = vpop.f32.mrf.mxu0
        %v293 = vadd.f32 %v193, %v292
        %v294 = vpop.f32.mrf.mxu0
        %v295 = vadd.f32 %v198, %v294
        %296 = vmatmul.bf16.gmra.mxu0 %v275
        %v297 = vpop.f32.mrf.mxu0
        %v298 = vadd.f32 %v203, %v297
        %v299 = vpop.f32.mrf.mxu0
        %v300 = vadd.f32 %v208, %v299
        %301 = vmatmul.bf16.gmra.mxu0 %v278
        %v302 = vpop.f32.mrf.mxu0
        %v303 = vadd.f32 %v213, %v302
        %v304 = vpop.f32.mrf.mxu0
        %v305 = vadd.f32 %v218, %v304
        %306 = vmatmul.bf16.gmra.mxu0 %v281
        %v307 = vpop.f32.mrf.mxu0
        %v308 = vadd.f32 %v223, %v307
        %v309 = vpop.f32.mrf.mxu0
        %v310 = vadd.f32 %v228, %v309
        %311 = vdwg.mxu0
        %312 = vmatpush.bf16.msra.mxu0 0
        %313 = vmatpush.bf16.msra.mxu0 0
        %314 = vmatpush.bf16.msra.mxu0 0
        %315 = vmatpush.bf16.msra.mxu0 0
        %316 = vmatpush.bf16.msra.mxu0 0
        %317 = vmatpush.bf16.msra.mxu0 0
        %318 = vmatpush.bf16.msra.mxu0 %v265
        %319 = vmatpush.bf16.msra.mxu0 %v263
        %320 = vmatmul.bf16.gmra.mxu0 %v272
        %v321 = vpop.f32.mrf.mxu0
        %v322 = vadd.f32 %v193, %v321
        %v323 = vpop.f32.mrf.mxu0
        %v324 = vadd.f32 %v198, %v323
        %325 = vmatmul.bf16.gmra.mxu0 %v275
        %v326 = vpop.f32.mrf.mxu0
        %v327 = vadd.f32 %v203, %v326
        %v328 = vpop.f32.mrf.mxu0
        %v329 = vadd.f32 %v208, %v328
        %330 = vmatmul.bf16.gmra.mxu0 %v278
        %v331 = vpop.f32.mrf.mxu0
        %v332 = vadd.f32 %v213, %v331
        %v333 = vpop.f32.mrf.mxu0
        %v334 = vadd.f32 %v218, %v333
        %335 = vmatmul.bf16.gmra.mxu0 %v281
        %v336 = vpop.f32.mrf.mxu0
        %v337 = vadd.f32 %v223, %v336
        %v338 = vpop.f32.mrf.mxu0
        %v339 = vadd.f32 %v228, %v338
        %340 = vdwg.mxu0
        %v341 = vpack.c.bf16 %v322, %v293
        %v342 = vpack.c.bf16 %v324, %v295
        %v343 = vpack.c.bf16 %v327, %v298
        %v344 = vpack.c.bf16 %v329, %v300
        %v345 = vpack.c.bf16 %v332, %v303
        %v346 = vpack.c.bf16 %v334, %v305
        %v347 = vpack.c.bf16 %v337, %v308
        %v348 = vpack.c.bf16 %v339, %v310
        %349 = vst [vmem:[%s163] sm:$0xff] %v341
        %350 = vst [vmem:[%s163 + $0x8] sm:$0xff] %v342
        %351 = vst [vmem:[%s163 + $0x10] sm:$0xff] %v343
        %352 = vst [vmem:[%s163 + $0x18] sm:$0xff] %v344
        %353 = vst [vmem:[%s163 + $0x20] sm:$0xff] %v345
        %354 = vst [vmem:[%s163 + $0x28] sm:$0xff] %v346
        %355 = vst [vmem:[%s163 + $0x30] sm:$0xff] %v347
        %356 = vst [vmem:[%s163 + $0x38] sm:$0xff] %v348
        %s357 = sand.u32 %s93, 1
        %s358 = scalar_lea.sflag [#allocation3], %s357
        %s359 = sand.u32 %s93, 1
        %s360 = smul.addr %s359, 64
        %s361 = scalar_lea.vmem [#allocation2], %s360
        // Predicated region
        $region33: #{tpu_custom_call.1} parent=31 // pred_check
          %p362 = pneg %p103
        $region34: #{tpu_custom_call.1} parent=31 // pred_check_branch
          %364 = sbr.rel (%p362) target = $region36
        $region35: #{tpu_custom_call.1} parent=31 // pred_region
          %366 = vsyncadd %s358, 0
          %s367 = smul.addr %s17, 16
          %s368 = smul.addr %s367, 4
          %s369 = scalar_lea.hbm %s3, %s368
          %s370 = sshll.u32 %s361, 4
          %s371 = int_to_ptr.vmem [resolvable:$true] %s370
          %s372 = sshll.u32 %s369, 4
          %s373 = int_to_ptr.hbm [resolvable:$true] %s372
          %378 = dma.vmem_to_hbm [thread:$0]  %s371, 1024, %s373, %s358, 128, 128, 8
        $region36: #{tpu_custom_call.1} parent=31 // pred_fallthru
          _
      $region32: #{tpu_custom_call.1} parent=5 // pred_fallthru
        _
      %p379 = scmp.le.s32.totalorder 2, %s12
      // Predicated region
      $region37: #{tpu_custom_call.1} parent=5 // pred_check
        %p380 = pneg %p379
      $region38: #{tpu_custom_call.1} parent=5 // pred_check_branch
        %382 = sbr.rel (%p380) target = $region40
      $region39: #{tpu_custom_call.1} parent=5 // pred_region
        %s383 = ssub.s32 %s12, 2
        // Predicated region
        $region41: #{tpu_custom_call.1} parent=39 // pred_check
          %p384 = pneg %p109
        $region42: #{tpu_custom_call.1} parent=39 // pred_check_branch
          %386 = sbr.rel (%p384) target = $region44
        $region43: #{tpu_custom_call.1} parent=39 // pred_region
          %s387 = sand.u32 %s94, 1
          %s388 = scalar_lea.sflag [#allocation3], %s387
          %s389 = sand.u32 %s94, 1
          %s390 = smul.addr %s389, 64
          %s391 = scalar_lea.vmem [#allocation2], %s390
          %393 = dma.done %s388, 1024
        $region44: #{tpu_custom_call.1} parent=39 // pred_fallthru
          _
      $region40: #{tpu_custom_call.1} parent=5 // pred_fallthru
        _
    $region6: #{tpu_custom_call.1} parent=1 // loop_footer
      %s16 = sadd.s32 1, %s12
    $region7: #{tpu_custom_call.1} parent=1 // loop_footer_branch
      %11 = sbr.rel target = $region3
    $region8: #{tpu_custom_call.1} parent=1 // loop_exit
      _
    %394 = vsyncpa [#allocation3], 1
    %s395 = scalar_lea.sflag [#allocation3], 1
    %396 = vsyncpa %s395, 1

</llo_original>
